<compile_context>
chip_gen: v7x
topology: tpu7x:2x2x1
jax: 0.10.0
libtpu: 0.0.40
codegen_flags: <defaults>
</compile_context>

<pallas_src>
import jax
import jax.numpy as jnp
from jax import lax
from jax.experimental import pallas as pl
from jax.experimental.pallas import tpu as pltpu


def _round_up(x: int, m: int) -> int:
    return (x + m - 1) // m * m


def gnn_scatter_kernel(tcount_ref, rows_ref, c_ref, b_ref, r_ref):
    """One grid step: scatter-add one TE-edge tile into one (1, NV) vertex block.

    tcount_ref : SMEM (NVB,) int32  -- number of real edge tiles per vertex block (prefetched)
    rows_ref   : VMEM (TE, 1) int32 -- destination vertex per edge (sorted/packed; padding = -1)
    c_ref      : VMEM (1, TE) f32   -- c_e = A_e * x_{col(e)} per edge (padding = 0)
    b_ref      : VMEM (1, NV) f32   -- b for this vertex block
    r_ref      : VMEM (1, NV) f32   -- residual accumulator, resident across the edge axis
    """
    vb = pl.program_id(0)
    ke = pl.program_id(1)
    TE = rows_ref.shape[0]
    NV = r_ref.shape[1]

    @pl.when(ke == 0)
    def _init():
        r_ref[...] = b_ref[...]

    @pl.when(ke < tcount_ref[vb])
    def _accumulate():
        # local row id within this vertex block; padding rows (-1) never match the iota.
        local = rows_ref[...] - vb * NV                               # (TE, 1) int32
        iota_nv = lax.broadcasted_iota(jnp.int32, (TE, NV), 1)        # (TE, NV)
        onehot = jnp.where(local == iota_nv, jnp.float32(1.0), jnp.float32(0.0))  # (TE, NV)
        # Canonical (1,TE) x (TE,NV) MXU matmul -> lane-dense (1, NV) partial scatter-sum.
        cbar = lax.dot_general(c_ref[...], onehot,
                               dimension_numbers=(((1,), (0,)), ((), ())),
                               preferred_element_type=jnp.float32)    # (1, NV)
        r_ref[...] = r_ref[...] - cbar


def gnn_residual(vertex_attr, edgeij_pair, edge_attr, *, edge_tile=512, vertex_tile=512):
    """vertex_attr (N,2) f32 [b,x], edgeij_pair (2,E) int32 [row;col], edge_attr (E,1) f32 -> r (N,1)."""
    N = int(vertex_attr.shape[0])
    E = int(edgeij_pair.shape[1])

    b = vertex_attr[:, 0].astype(jnp.float32)
    x = vertex_attr[:, 1].astype(jnp.float32)
    rows = edgeij_pair[0].astype(jnp.int32)
    cols = edgeij_pair[1].astype(jnp.int32)
    A = edge_attr[:, 0].astype(jnp.float32)

    # --- EdgeUpdate (gather + scale), one O(E) XLA gather fusion in the wrapper. ---
    # TODO(synk): move this gather in-kernel (dynamic lane-gather / DMA gather).
    c = A * x[cols]

    # --- lane-dense tile sizes (multiples of 128) ---
    NV = max(128, min(int(vertex_tile) // 128 * 128, _round_up(N, 128)))
    TE = max(128, min(int(edge_tile) // 128 * 128, _round_up(max(E, 1), 128)))
    N_pad = _round_up(N, NV)
    NVB = N_pad // NV

    # --- sort edges by destination row and pack each vertex block's edges into KT*TE slots ---
    order = jnp.argsort(rows)
    rows_s = rows[order]
    c_s = c[order]
    blk = rows_s // NV                                          # non-decreasing block id per edge
    counts = jnp.bincount(blk, length=NVB).astype(jnp.int32)    # edges per vertex block
    tiles = (counts + TE - 1) // TE                             # real edge tiles per block
    # Static grid extent (host-side value; wrapper is meant to run eagerly).
    KT = max(int(jnp.max(tiles)), 1)
    cap = KT * TE
    total = NVB * cap
    starts = jnp.concatenate(
        [jnp.zeros((1,), jnp.int32), jnp.cumsum(counts)[:-1].astype(jnp.int32)])
    within = jnp.arange(E, dtype=jnp.int32) - starts[blk]
    dest = blk * cap + within
    rows_pad = jnp.full((total,), -1, dtype=jnp.int32).at[dest].set(rows_s)
    c_pad = jnp.zeros((total,), dtype=jnp.float32).at[dest].set(c_s)

    rows_col = rows_pad.reshape(total, 1)       # edge rows as a column -> (TE, 1) blocks
    c_row = c_pad.reshape(1, total)             # edge values lane-dense -> (1, TE) blocks
    b_row = jnp.pad(b, (0, N_pad - N)).reshape(1, N_pad)
    tcount = tiles.astype(jnp.int32)            # scalar-prefetched per-block tile counts

    # --- VMEM budget derived from the actual tile sizes (fits v7x's 64 MiB VMEM) ---
    vmem_bytes = (2 * TE * 128 * 4      # (TE,1) int32 row tiles (lane-padded), double-buffered
                  + 2 * 8 * TE * 4      # (1,TE) c tiles, double-buffered
                  + 4 * 8 * NV * 4      # (1,NV) b + r blocks
                  + 3 * TE * NV * 4)    # (TE,NV) iota / one-hot / matmul staging
    vmem_limit = int(min(max(2 * vmem_bytes, 8 * 1024 * 1024), 48 * 1024 * 1024))

    r_row = pl.pallas_call(
        gnn_scatter_kernel,
        out_shape=jax.ShapeDtypeStruct((1, N_pad), jnp.float32),
        grid_spec=pltpu.PrefetchScalarGridSpec(
            num_scalar_prefetch=1,
            grid=(NVB, KT),
            in_specs=[
                pl.BlockSpec((TE, 1), lambda vb, ke, tc: (vb * KT + ke, 0)),   # edge rows
                pl.BlockSpec((1, TE), lambda vb, ke, tc: (0, vb * KT + ke)),   # edge values c
                pl.BlockSpec((1, NV), lambda vb, ke, tc: (0, vb)),             # b (per block)
            ],
            out_specs=pl.BlockSpec((1, NV), lambda vb, ke, tc: (0, vb)),       # resident accumulator
        ),
        compiler_params=pltpu.CompilerParams(
            dimension_semantics=("parallel", "arbitrary"),   # vertex blocks parallel, edges reduce
            vmem_limit_bytes=vmem_limit,
        ),
    )(tcount, rows_col, c_row, b_row)

    return r_row[0, :N].reshape(N, 1)


def gnn_residual_ref(vertex_attr, edgeij_pair, edge_attr):
    """Pure-JAX reference of the PyTorch forward."""
    rows = edgeij_pair[0]
    cols = edgeij_pair[1]
    c = edge_attr[:, 0] * vertex_attr[cols, 1]            # EdgeUpdate: c_ij = A_ij * x_j
    cbar = jax.ops.segment_sum(c, rows, num_segments=vertex_attr.shape[0])
    return (vertex_attr[:, 0] - cbar).reshape(-1, 1)      # r_i = b_i - cbar_i


if __name__ == "__main__":
    key = jax.random.PRNGKey(0)
    k1, k2, k3, k4, k5, k6 = jax.random.split(key, 6)

    # Small case matching the module's expected shapes.
    N, E = 8, 16
    vertex_attr = jax.random.normal(k1, (N, 2), dtype=jnp.float32)        # [b_i, x_i]
    edgeij_pair = jax.random.randint(k2, (2, E), 0, N, dtype=jnp.int32)   # [row; col]
    edge_attr = jax.random.normal(k3, (E, 1), dtype=jnp.float32)          # A_ij

    r = jax.block_until_ready(gnn_residual(vertex_attr, edgeij_pair, edge_attr))
    r_ref = gnn_residual_ref(vertex_attr, edgeij_pair, edge_attr)
    assert r.shape == (N, 1)
    assert jnp.allclose(r, r_ref, atol=1e-4, rtol=1e-4), (r, r_ref)

    # Larger case: multiple vertex blocks (parallel axis) + multiple edge tiles per block,
    # with uneven per-block edge counts exercising the scalar-prefetched tile gating.
    N2, E2 = 300, 1000
    vertex_attr2 = jax.random.normal(k4, (N2, 2), dtype=jnp.float32)
    edgeij_pair2 = jax.random.randint(k5, (2, E2), 0, N2, dtype=jnp.int32)
    edge_attr2 = jax.random.normal(k6, (E2, 1), dtype=jnp.float32)

    r2 = jax.block_until_ready(
        gnn_residual(vertex_attr2, edgeij_pair2, edge_attr2, edge_tile=128, vertex_tile=128))
    r2_ref = gnn_residual_ref(vertex_attr2, edgeij_pair2, edge_attr2)
    assert r2.shape == (N2, 1)
    assert jnp.allclose(r2, r2_ref, atol=1e-4, rtol=1e-4), (r2, r2_ref)

    print("KERNEL_OK")
</pallas_src>

<mosaic_0001>
module attributes {stable_mosaic.version = 11 : i64} {
  func.func @gnn_scatter_kernel(%arg0: i32, %arg1: i32, %arg2: memref<1xi32, #tpu.memory_space<smem>>, %arg3: memref<128x1xi32, #tpu.memory_space<vmem>>, %arg4: memref<1x128xf32, #tpu.memory_space<vmem>>, %arg5: memref<1x128xf32, #tpu.memory_space<vmem>>, %arg6: memref<1x128xf32, #tpu.memory_space<vmem>>) attributes {dimension_semantics = [#tpu.dimension_semantics<parallel>, #tpu.dimension_semantics<arbitrary>], iteration_bounds = array<i64: 1, 1>, scalar_prefetch = 1 : i64, scratch_operands = 0 : i64, tpu.core_type = #tpu.core_type<tc>, window_params = [{transform_indices = @transform_0, window_bounds = array<i64: 128, 1>}, {transform_indices = @transform_1, window_bounds = array<i64: 1, 128>}, {transform_indices = @transform_2, window_bounds = array<i64: 1, 128>}, {transform_indices = @transform_3, window_bounds = array<i64: 1, 128>}]} {
    %c0_i32 = arith.constant 0 : i32
    %0 = arith.cmpi eq, %arg1, %c0_i32 : i32
    %1 = arith.extui %0 : i1 to i32
    %c0_i32_0 = arith.constant 0 : i32
    %2 = arith.cmpi ne, %1, %c0_i32_0 : i32
    scf.if %2 {
      %c0 = arith.constant 0 : index
      %c0_2 = arith.constant 0 : index
      %8 = vector.load %arg5[%c0, %c0_2] : memref<1x128xf32, #tpu.memory_space<vmem>>, vector<1x128xf32>
      %c0_3 = arith.constant 0 : index
      %c0_4 = arith.constant 0 : index
      %9 = vector.load %arg6[%c0_3, %c0_4] : memref<1x128xf32, #tpu.memory_space<vmem>>, vector<1x128xf32>
      tpu.vector_store %arg6[%c0_3, %c0_4], %8 {strides = array<i32>} : memref<1x128xf32, #tpu.memory_space<vmem>>, vector<1x128xf32>,
    } else {
    }
    %3 = arith.index_cast %arg0 : i32 to index
    %4 = memref.load %arg2[%3] : memref<1xi32, #tpu.memory_space<smem>>
    %5 = arith.cmpi slt, %arg1, %4 : i32
    %6 = arith.extui %5 : i1 to i32
    %c0_i32_1 = arith.constant 0 : i32
    %7 = arith.cmpi ne, %6, %c0_i32_1 : i32
    scf.if %7 {
      %c0 = arith.constant 0 : index
      %c0_2 = arith.constant 0 : index
      %8 = vector.load %arg3[%c0, %c0_2] : memref<128x1xi32, #tpu.memory_space<vmem>>, vector<128x1xi32>
      %c128_i32 = arith.constant 128 : i32
      %9 = arith.muli %arg0, %c128_i32 : i32
      %10 = vector.broadcast %9 : i32 to vector<128x1xi32>
      %11 = arith.subi %8, %10 : vector<128x1xi32>
      %12 = tpu.iota {dimensions = array<i32: 1>} : vector<128x128xi32>
      %13 = vector.broadcast %11 : vector<128x1xi32> to vector<128x128xi32>
      %14 = arith.cmpi eq, %13, %12 : vector<128x128xi32>
      %cst = arith.constant 1.000000e+00 : f32
      %cst_3 = arith.constant 0.000000e+00 : f32
      %15 = vector.broadcast %cst : f32 to vector<128x128xf32>
      %16 = vector.broadcast %cst_3 : f32 to vector<128x128xf32>
      %17 = arith.select %14, %15, %16 : vector<128x128xi1>, vector<128x128xf32>
      %c0_4 = arith.constant 0 : index
      %c0_5 = arith.constant 0 : index
      %18 = vector.load %arg4[%c0_4, %c0_5] : memref<1x128xf32, #tpu.memory_space<vmem>>, vector<1x128xf32>
      %cst_6 = arith.constant dense<0.000000e+00> : vector<1x128xf32>
      %19 = tpu.matmul %18, %17, %cst_6 {dimension_numbers = #tpu.dot_dimension_numbers<[1], [0], [0], [1], [0, 0, 1, 1], [], []>} : vector<1x128xf32>, vector<128x128xf32>, vector<1x128xf32> -> vector<1x128xf32>
      %c0_7 = arith.constant 0 : index
      %c0_8 = arith.constant 0 : index
      %20 = vector.load %arg6[%c0_7, %c0_8] : memref<1x128xf32, #tpu.memory_space<vmem>>, vector<1x128xf32>
      %21 = arith.subf %20, %19 : vector<1x128xf32>
      %c0_9 = arith.constant 0 : index
      %c0_10 = arith.constant 0 : index
      %22 = vector.load %arg6[%c0_9, %c0_10] : memref<1x128xf32, #tpu.memory_space<vmem>>, vector<1x128xf32>
      tpu.vector_store %arg6[%c0_9, %c0_10], %21 {strides = array<i32>} : memref<1x128xf32, #tpu.memory_space<vmem>>, vector<1x128xf32>,
    } else {
    }
    return
  }
  func.func @transform_0(%arg0: i32, %arg1: i32, %arg2: memref<1xi32, #tpu.memory_space<smem>>) -> (i32, i32) {
    %c1_i32 = arith.constant 1 : i32
    %0 = arith.muli %arg0, %c1_i32 : i32
    %1 = arith.addi %0, %arg1 : i32
    %c0_i32 = arith.constant 0 : i32
    %c0_i32_0 = arith.constant 0 : i32
    return %1, %c0_i32 : i32, i32
  }
  func.func @transform_1(%arg0: i32, %arg1: i32, %arg2: memref<1xi32, #tpu.memory_space<smem>>) -> (i32, i32) {
    %c1_i32 = arith.constant 1 : i32
    %0 = arith.muli %arg0, %c1_i32 : i32
    %1 = arith.addi %0, %arg1 : i32
    %c0_i32 = arith.constant 0 : i32
    %c0_i32_0 = arith.constant 0 : i32
    return %c0_i32, %1 : i32, i32
  }
  func.func @transform_2(%arg0: i32, %arg1: i32, %arg2: memref<1xi32, #tpu.memory_space<smem>>) -> (i32, i32) {
    %c0_i32 = arith.constant 0 : i32
    %c0_i32_0 = arith.constant 0 : i32
    return %c0_i32, %arg0 : i32, i32
  }
  func.func @transform_3(%arg0: i32, %arg1: i32, %arg2: memref<1xi32, #tpu.memory_space<smem>>) -> (i32, i32) {
    %c0_i32 = arith.constant 0 : i32
    %c0_i32_0 = arith.constant 0 : i32
    return %c0_i32, %arg0 : i32, i32
  }
}

</mosaic_0001>

<llo_original>
// kernel: tpu_custom_call.1
$region0: #{tpu_custom_call.1}
  #allocation0 [shape = 'u32[]', space=smem, size = 0x4, offset = 0x4, fixed_abs, tag = 'smem constant byte address 0x4 - core index']
  #allocation1 [shape = 'u32[144,128]{1,0:T(1,128)}', space=vmem, size = 0x12000, scoped, tag = 'internal scratch']
  #allocation2 [shape = 's32[1]{0}', space=sflag, size = 0x4, scoped, tag = 'scoped memory for tpu_custom_call.1']
  #allocation3 [shape = 's32[1]{0:T(128)S(6)}', space=smem, size = 0x200, scoped, tag = 'prefetched SMEM operand 0']
  %s0 = inlined_call_operand.<no memory space> [shape: s32[1], index: 0, kind: input, shape index: {}]
  %s1 = inlined_call_operand.vmem [shape: s32[128,1], index: 1, kind: input, shape index: {}]
  %s2 = inlined_call_operand.vmem [shape: f32[1,128], index: 2, kind: input, shape index: {}]
  %s3 = inlined_call_operand.vmem [shape: f32[1,128], index: 3, kind: input, shape index: {}]
  %s4 = inlined_call_operand.hbm [shape: f32[1,128], index: 4, kind: output, shape index: {}]
  %s5 = sld [smem:[#allocation0]]
  $region30: #{tpu_custom_call.1} parent=0
    _
  %s7 = ssub.s32 1, %s5
  %s8 = scalar_select 0, %s7, %s5
  %9 = sst [smem:[#allocation3]] %s0
  $region1: #{tpu_custom_call.1} parent=0
    #allocation4 [shape = 'u8[512]{0}', space=vmem, size = 0x400, scoped, tag = 'output window, operand 0, single buffered']
    #allocation5 [shape = 's32[1]{0}', space=sflag, size = 0x4, scoped, tag = 'scoped memory for tpu_custom_call.1']
    %10 = vsyncpa [#allocation5], 0
    // Predicated region
    $region2: #{tpu_custom_call.1} parent=1 // pred_check
      _
    $region3: #{tpu_custom_call.1} parent=1 // pred_check_branch
      %12 = sbr.rel (0) target = $region5
    $region4: #{tpu_custom_call.1} parent=1 // pred_region
      %s13 = sadd.s32 0, 0
      %s14 = smul.u32 16, %s13
      %p15 = scmp.lt.s32.totalorder %s14, 15
      %s16 = scalar_select %p15, %s14, 15
      %s17 = smul.addr %s16, 8
      %s18 = scalar_lea.vmem %s1, %s17
      %s19 = sadd.s32 0, 0
      %s20 = smul.u32 16, %s19
    $region5: #{tpu_custom_call.1} parent=1 // pred_fallthru
      _
    // Predicated region
    $region6: #{tpu_custom_call.1} parent=1 // pred_check
      _
    $region7: #{tpu_custom_call.1} parent=1 // pred_check_branch
      %22 = sbr.rel (0) target = $region9
    $region8: #{tpu_custom_call.1} parent=1 // pred_region
      %s23 = sadd.s32 0, 0
      %p24 = scmp.lt.s32.totalorder %s23, 0
      %s25 = scalar_select %p24, %s23, 0
      %s26 = scalar_lea.vmem %s2, %s25
      %s27 = sadd.s32 0, 0
    $region9: #{tpu_custom_call.1} parent=1 // pred_fallthru
      _
    // Predicated region
    $region10: #{tpu_custom_call.1} parent=1 // pred_check
      _
    $region11: #{tpu_custom_call.1} parent=1 // pred_check_branch
      %29 = sbr.rel (0) target = $region13
    $region12: #{tpu_custom_call.1} parent=1 // pred_region
      _
    $region13: #{tpu_custom_call.1} parent=1 // pred_fallthru
      _
    %s30 = sadd.s32 0, 0
    %s31 = smul.u32 16, %s30
    %p32 = scmp.lt.s32.totalorder %s31, 15
    %s33 = scalar_select %p32, %s31, 15
    %s34 = smul.addr %s33, 8
    %s35 = scalar_lea.vmem %s1, %s34
    %s36 = sadd.s32 0, 0
    %p37 = scmp.lt.s32.totalorder %s36, 0
    %s38 = scalar_select %p37, %s36, 0
    %s39 = scalar_lea.vmem %s2, %s38
    %s40 = sadd.s32 0, 0
    %s41 = smul.u32 16, %s40
    %p42 = scmp.lt.s32.totalorder %s41, 15
    %s43 = scalar_select %p42, %s41, 15
    %s44 = smul.addr %s43, 8
    %s45 = scalar_lea.vmem %s1, %s44
    %s46 = sadd.s32 0, 0
    %s47 = smul.u32 16, %s46
    %s48 = sadd.s32 0, 0
    %p49 = scmp.lt.s32.totalorder %s48, 0
    %s50 = scalar_select %p49, %s48, 0
    %s51 = scalar_lea.vmem %s2, %s50
    %s52 = sadd.s32 0, 0
    %p53 = scmp.eq.s32.totalorder 0, 0
    // Predicated region
    $region14: #{tpu_custom_call.1} parent=1 // pred_check
      %p54 = pneg %p53
    $region15: #{tpu_custom_call.1} parent=1 // pred_check_branch
      %56 = sbr.rel (%p54) target = $region17
    $region16: #{tpu_custom_call.1} parent=1 // pred_region
      %v57 = vld [vmem:[%s3] sm:$0x1]
      %58 = vst [vmem:[#allocation4] sm:$0x1] %v57
    $region17: #{tpu_custom_call.1} parent=1 // pred_fallthru
      _
    %s59 = sld [smem:[#allocation3]]
    %p60 = scmp.lt.s32.totalorder 0, %s59
    // Predicated region
    $region18: #{tpu_custom_call.1} parent=1 // pred_check
      %p61 = pneg %p60
    $region19: #{tpu_custom_call.1} parent=1 // pred_check_branch
      %63 = sbr.rel (%p61) target = $region21
    $region20: #{tpu_custom_call.1} parent=1 // pred_region
      %v64 = vld [vmem:[%s45] sm:$0xff]
      %v65 = vld [vmem:[%s45 + $0x8] sm:$0xff]
      %v66 = vld [vmem:[%s45 + $0x10] sm:$0xff]
      %v67 = vld [vmem:[%s45 + $0x18] sm:$0xff]
      %v68 = vld [vmem:[%s45 + $0x20] sm:$0xff]
      %v69 = vld [vmem:[%s45 + $0x28] sm:$0xff]
      %v70 = vld [vmem:[%s45 + $0x30] sm:$0xff]
      %v71 = vld [vmem:[%s45 + $0x38] sm:$0xff]
      %v72 = vld [vmem:[%s45 + $0x40] sm:$0xff]
      %v73 = vld [vmem:[%s45 + $0x48] sm:$0xff]
      %v74 = vld [vmem:[%s45 + $0x50] sm:$0xff]
      %v75 = vld [vmem:[%s45 + $0x58] sm:$0xff]
      %v76 = vld [vmem:[%s45 + $0x60] sm:$0xff]
      %v77 = vld [vmem:[%s45 + $0x68] sm:$0xff]
      %v78 = vld [vmem:[%s45 + $0x70] sm:$0xff]
      %v79 = vld [vmem:[%s45 + $0x78] sm:$0xff]
      %s80 = smul.u32 0, 128
      %v81 = vstv %s80
      %v82 = vsub.s32 %v64, %v81
      %v83 = vsub.s32 %v65, %v81
      %v84 = vsub.s32 %v66, %v81
      %v85 = vsub.s32 %v67, %v81
      %v86 = vsub.s32 %v68, %v81
      %v87 = vsub.s32 %v69, %v81
      %v88 = vsub.s32 %v70, %v81
      %v89 = vsub.s32 %v71, %v81
      %v90 = vsub.s32 %v72, %v81
      %v91 = vsub.s32 %v73, %v81
      %v92 = vsub.s32 %v74, %v81
      %v93 = vsub.s32 %v75, %v81
      %v94 = vsub.s32 %v76, %v81
      %v95 = vsub.s32 %v77, %v81
      %v96 = vsub.s32 %v78, %v81
      %v97 = vsub.s32 %v79, %v81
      %v98 = vlaneseq
      %v99 = vand.u32 %v98, 127
      %100 = vset.pattern.permute.xlu0 0
      %101 = vperm.xlu0 %100, %v82
      %v102 = vpop.permute.xlu0 %101
      %103 = vset.pattern.permute.xlu0 0
      %104 = vperm.xlu0 %103, %v83
      %v105 = vpop.permute.xlu0 %104
      %106 = vset.pattern.permute.xlu0 0
      %107 = vperm.xlu0 %106, %v84
      %v108 = vpop.permute.xlu0 %107
      %109 = vset.pattern.permute.xlu0 0
      %110 = vperm.xlu0 %109, %v85
      %v111 = vpop.permute.xlu0 %110
      %112 = vset.pattern.permute.xlu0 0
      %113 = vperm.xlu0 %112, %v86
      %v114 = vpop.permute.xlu0 %113
      %115 = vset.pattern.permute.xlu0 0
      %116 = vperm.xlu0 %115, %v87
      %v117 = vpop.permute.xlu0 %116
      %118 = vset.pattern.permute.xlu0 0
      %119 = vperm.xlu0 %118, %v88
      %v120 = vpop.permute.xlu0 %119
      %121 = vset.pattern.permute.xlu0 0
      %122 = vperm.xlu0 %121, %v89
      %v123 = vpop.permute.xlu0 %122
      %124 = vset.pattern.permute.xlu0 0
      %125 = vperm.xlu0 %124, %v90
      %v126 = vpop.permute.xlu0 %125
      %127 = vset.pattern.permute.xlu0 0
      %128 = vperm.xlu0 %127, %v91
      %v129 = vpop.permute.xlu0 %128
      %130 = vset.pattern.permute.xlu0 0
      %131 = vperm.xlu0 %130, %v92
      %v132 = vpop.permute.xlu0 %131
      %133 = vset.pattern.permute.xlu0 0
      %134 = vperm.xlu0 %133, %v93
      %v135 = vpop.permute.xlu0 %134
      %136 = vset.pattern.permute.xlu0 0
      %137 = vperm.xlu0 %136, %v94
      %v138 = vpop.permute.xlu0 %137
      %139 = vset.pattern.permute.xlu0 0
      %140 = vperm.xlu0 %139, %v95
      %v141 = vpop.permute.xlu0 %140
      %142 = vset.pattern.permute.xlu0 0
      %143 = vperm.xlu0 %142, %v96
      %v144 = vpop.permute.xlu0 %143
      %145 = vset.pattern.permute.xlu0 0
      %146 = vperm.xlu0 %145, %v97
      %v147 = vpop.permute.xlu0 %146
      %vm148 = vcmp.eq.s32.totalorder %v102, %v99
      %vm149 = vcmp.eq.s32.totalorder %v105, %v99
      %vm150 = vcmp.eq.s32.totalorder %v108, %v99
      %vm151 = vcmp.eq.s32.totalorder %v111, %v99
      %vm152 = vcmp.eq.s32.totalorder %v114, %v99
      %vm153 = vcmp.eq.s32.totalorder %v117, %v99
      %vm154 = vcmp.eq.s32.totalorder %v120, %v99
      %vm155 = vcmp.eq.s32.totalorder %v123, %v99
      %vm156 = vcmp.eq.s32.totalorder %v126, %v99
      %vm157 = vcmp.eq.s32.totalorder %v129, %v99
      %vm158 = vcmp.eq.s32.totalorder %v132, %v99
      %vm159 = vcmp.eq.s32.totalorder %v135, %v99
      %vm160 = vcmp.eq.s32.totalorder %v138, %v99
      %vm161 = vcmp.eq.s32.totalorder %v141, %v99
      %vm162 = vcmp.eq.s32.totalorder %v144, %v99
      %vm163 = vcmp.eq.s32.totalorder %v147, %v99
      %v164 = vsel %vm148, 1.0, 0.0
      %v165 = vsel %vm149, 1.0, 0.0
      %v166 = vsel %vm150, 1.0, 0.0
      %v167 = vsel %vm151, 1.0, 0.0
      %v168 = vsel %vm152, 1.0, 0.0
      %v169 = vsel %vm153, 1.0, 0.0
      %v170 = vsel %vm154, 1.0, 0.0
      %v171 = vsel %vm155, 1.0, 0.0
      %v172 = vsel %vm156, 1.0, 0.0
      %v173 = vsel %vm157, 1.0, 0.0
      %v174 = vsel %vm158, 1.0, 0.0
      %v175 = vsel %vm159, 1.0, 0.0
      %v176 = vsel %vm160, 1.0, 0.0
      %v177 = vsel %vm161, 1.0, 0.0
      %v178 = vsel %vm162, 1.0, 0.0
      %v179 = vsel %vm163, 1.0, 0.0
      %v180 = vld [vmem:[%s51] sm:$0x1]
      %181 = vmatprep.subr.mxu0 0.0
      %182 = vmatpush1.msra.mxu0 %v164
      %183 = vmatprep.subr.mxu0 0.0
      %184 = vmatpush1.msra.mxu0 %v165
      %185 = vmatprep.subr.mxu0 0.0
      %186 = vmatpush1.msra.mxu0 %v166
      %187 = vmatprep.subr.mxu0 0.0
      %188 = vmatpush1.msra.mxu0 %v167
      %189 = vmatprep.subr.mxu0 0.0
      %190 = vmatpush1.msra.mxu0 %v168
      %191 = vmatprep.subr.mxu0 0.0
      %192 = vmatpush1.msra.mxu0 %v169
      %193 = vmatprep.subr.mxu0 0.0
      %194 = vmatpush1.msra.mxu0 %v170
      %195 = vmatprep.subr.mxu0 0.0
      %196 = vmatpush1.msra.mxu0 %v171
      %197 = vmatprep.subr.mxu0 0.0
      %198 = vmatpush1.msra.mxu0 %v172
      %199 = vmatprep.subr.mxu0 0.0
      %200 = vmatpush1.msra.mxu0 %v173
      %201 = vmatprep.subr.mxu0 0.0
      %202 = vmatpush1.msra.mxu0 %v174
      %203 = vmatprep.subr.mxu0 0.0
      %204 = vmatpush1.msra.mxu0 %v175
      %205 = vmatprep.subr.mxu0 0.0
      %206 = vmatpush1.msra.mxu0 %v176
      %207 = vmatprep.subr.mxu0 0.0
      %208 = vmatpush1.msra.mxu0 %v177
      %209 = vmatprep.subr.mxu0 0.0
      %210 = vmatpush1.msra.mxu0 %v178
      %211 = vmatprep.subr.mxu0 0.0
      %212 = vmatpush1.msra.mxu0 %v179
      %213 = vmatprep.subr.mxu0 0.0
      %214 = vmatpush1.msra.mxu0 0.0
      %215 = vmatprep.subr.mxu0 0.0
      %216 = vmatpush1.msra.mxu0 0.0
      %217 = vmatprep.subr.mxu0 0.0
      %218 = vmatpush1.msra.mxu0 0.0
      %219 = vmatprep.subr.mxu0 0.0
      %220 = vmatpush1.msra.mxu0 0.0
      %221 = vmatprep.subr.mxu0 0.0
      %222 = vmatpush1.msra.mxu0 0.0
      %223 = vmatprep.subr.mxu0 0.0
      %224 = vmatpush1.msra.mxu0 0.0
      %225 = vmatprep.subr.mxu0 0.0
      %226 = vmatpush1.msra.mxu0 0.0
      %227 = vmatprep.subr.mxu0 0.0
      %228 = vmatpush1.msra.mxu0 0.0
      %229 = vmatprep.subr.mxu0 0.0
      %230 = vmatpush1.msra.mxu0 0.0
      %231 = vmatprep.subr.mxu0 0.0
      %232 = vmatpush1.msra.mxu0 0.0
      %233 = vmatprep.subr.mxu0 0.0
      %234 = vmatpush1.msra.mxu0 0.0
      %235 = vmatprep.subr.mxu0 0.0
      %236 = vmatpush1.msra.mxu0 0.0
      %237 = vmatprep.subr.mxu0 0.0
      %238 = vmatpush1.msra.mxu0 0.0
      %239 = vmatprep.subr.mxu0 0.0
      %240 = vmatpush1.msra.mxu0 0.0
      %241 = vmatprep.subr.mxu0 0.0
      %242 = vmatpush1.msra.mxu0 0.0
      %243 = vmatprep.subr.mxu0 0.0
      %244 = vmatpush1.msra.mxu0 0.0
      %245 = vmatprep.mubr.f32.mxu0 0.0
      %246 = vmatmul.mubr.f32.gmra.mrb[0].mxu0 %v180
      %v247 = vpop.f32.mrb[0].mxu0
      %v248 = vadd.f32 0.0, %v247
      %v249 = vpop.f32.mrb[0].mxu0
      %250 = vdwg.mxu0
      %v251 = vld [vmem:[#allocation4] sm:$0x1]
      %v252 = vsub.f32 %v251, %v248
      %253 = vst [vmem:[#allocation4] sm:$0x1] %v252
    $region21: #{tpu_custom_call.1} parent=1 // pred_fallthru
      _
    // Predicated region
    $region22: #{tpu_custom_call.1} parent=1 // pred_check
      _
    $region23: #{tpu_custom_call.1} parent=1 // pred_check_branch
      %255 = sbr.rel (0) target = $region25
    $region24: #{tpu_custom_call.1} parent=1 // pred_region
      %s257 = ssub.s32 16, 16
      %258 = vsyncadd [#allocation5], %s257
      %s260 = sshll.u32 [#allocation4], 4
      %s261 = int_to_ptr.vmem [resolvable:$true] %s260
      %263 = dma.vmem_to_hbm [thread:$0]  %s261, 16, %s4, [#allocation5]
    $region25: #{tpu_custom_call.1} parent=1 // pred_fallthru
      _
    // Predicated region
    $region26: #{tpu_custom_call.1} parent=1 // pred_check
      _
    $region27: #{tpu_custom_call.1} parent=1 // pred_check_branch
      %265 = sbr.rel (0) target = $region29
    $region28: #{tpu_custom_call.1} parent=1 // pred_region
      %266 = dma.done [#allocation5], 16
    $region29: #{tpu_custom_call.1} parent=1 // pred_fallthru
      _
    %267 = vsyncpa [#allocation5], 1

</llo_original>
